<compile_context>
chip_gen: v5e
topology: v5e:2x2
jax: 0.10.0
libtpu: 0.0.40
codegen_flags: <defaults>
</compile_context>

<pallas_src>
import jax
import jax.numpy as jnp
from jax.experimental import pallas as pl
from jax.experimental.pallas import tpu as pltpu


def _make_kernel(embed_count: int, real_dims, embed_dim: int):
    """Kernel body over flattened [ROWS, D] tiles: sum the embedding refs,
    then write them and the realvalue refs into the concatenated output tile
    at static lane offsets."""
    num_real = len(real_dims)

    def kernel(*refs):
        emb_refs = refs[:embed_count]
        real_refs = refs[embed_count:embed_count + num_real]
        out_ref = refs[embed_count + num_real]

        # sum(embeddings) — pure VPU elementwise work (input dtype, matching
        # the PyTorch module's `sum(embeddings)` semantics).
        acc = emb_refs[0][...]
        for r in emb_refs[1:]:
            acc = acc + r[...]
        out_ref[:, 0:embed_dim] = acc

        # concat realvalue tensors after the summed embedding (static offsets;
        # lane-aligned offsets lower to unmasked full-width stores).
        off = embed_dim
        for r, d in zip(real_refs, real_dims):
            out_ref[:, off:off + d] = r[...]
            off += d

    return kernel


def _round_up(x: int, m: int) -> int:
    return ((x + m - 1) // m) * m


def sum_embedding_projector(inputs, embed_count: int):
    """Pallas implementation of UnitTestSumEmbeddingProjector.forward.

    inputs: list of jnp arrays, first `embed_count` with shape [B, S, E]
            (summed elementwise), the rest [B, S, R_i] (concatenated).
    Returns [B, S, E + sum(R_i)].
    """
    embeddings = list(inputs[:embed_count])
    realvalues = list(inputs[embed_count:])

    B, S, E = embeddings[0].shape
    real_dims = [int(rv.shape[2]) for rv in realvalues]
    out_dim = E + sum(real_dims)
    dtype = embeddings[0].dtype

    for t in embeddings + realvalues:
        assert t.shape[0] == B and t.shape[1] == S, "leading dims must match"
        assert t.dtype == dtype, "all inputs must share a dtype"

    # ---- flatten [B, S, D] -> [B*S, D] so we can grid over big row tiles ----
    rows = B * S
    flat_inputs = [t.reshape(rows, t.shape[2]) for t in embeddings + realvalues]

    # ---- choose the largest row tile whose double-buffered working set fits
    #      comfortably in VMEM on every TPU generation (v7x: 64 MiB physical).
    itemsize = jnp.dtype(dtype).itemsize
    bytes_per_row = (embed_count * E + sum(real_dims) + out_dim) * itemsize
    working_set_budget = 16 * 1024 * 1024  # double-buffered target
    max_tile_rows = max(8, (working_set_budget // (2 * bytes_per_row)) // 8 * 8)
    tile_rows = int(min(2048, max_tile_rows, _round_up(rows, 8)))

    # ---- pad rows so the grid divides evenly (boundary handling in wrapper) --
    num_tiles = (rows + tile_rows - 1) // tile_rows
    padded_rows = num_tiles * tile_rows
    if padded_rows != rows:
        flat_inputs = [
            jnp.pad(t, ((0, padded_rows - rows), (0, 0))) for t in flat_inputs
        ]

    kernel = _make_kernel(embed_count, real_dims, E)

    in_specs = []
    for _ in range(embed_count):
        in_specs.append(pl.BlockSpec((tile_rows, E), lambda i: (i, 0)))
    for d in real_dims:
        in_specs.append(pl.BlockSpec((tile_rows, d), lambda i: (i, 0)))
    out_specs = pl.BlockSpec((tile_rows, out_dim), lambda i: (i, 0))

    # Explicit scoped-VMEM limit: plenty of headroom over the <=16 MiB
    # double-buffered working set, and safe on v7x (64 MiB physical VMEM).
    vmem_limit = 32 * 1024 * 1024

    out_flat = pl.pallas_call(
        kernel,
        out_shape=jax.ShapeDtypeStruct((padded_rows, out_dim), dtype),
        grid_spec=pltpu.PrefetchScalarGridSpec(
            num_scalar_prefetch=0,
            grid=(num_tiles,),
            in_specs=in_specs,
            out_specs=out_specs,
        ),
        compiler_params=pltpu.CompilerParams(
            dimension_semantics=("parallel",),
            vmem_limit_bytes=vmem_limit,
        ),
    )(*flat_inputs)

    return out_flat[:rows].reshape(B, S, out_dim)


def reference(inputs, embed_count: int):
    embeddings = inputs[:embed_count]
    realvalues = inputs[embed_count:]
    summed = embeddings[0]
    for e in embeddings[1:]:
        summed = summed + e
    return jnp.concatenate([summed] + list(realvalues), axis=2)


if __name__ == "__main__":
    key = jax.random.PRNGKey(0)

    # Small shapes consistent with the module's forward:
    #   embed_count = 3 embeddings of shape [B, S, E]
    #   2 realvalue tensors of shape [B, S, R_i]
    # Feature dims are multiples of 128 so every concat segment is lane-dense
    # (unmasked vector stores).
    B, S, E = 2, 8, 128
    embed_count = 3
    real_dims = [128, 128]

    keys = jax.random.split(key, embed_count + len(real_dims))
    inputs = []
    for i in range(embed_count):
        inputs.append(jax.random.normal(keys[i], (B, S, E), dtype=jnp.float32))
    for j, rd in enumerate(real_dims):
        inputs.append(
            jax.random.normal(keys[embed_count + j], (B, S, rd),
                              dtype=jnp.float32))

    out = sum_embedding_projector(inputs, embed_count)
    out = jax.block_until_ready(out)

    ref = reference(inputs, embed_count)
    assert out.shape == (B, S, E + sum(real_dims)), out.shape
    assert jnp.allclose(out, ref, atol=1e-6, rtol=1e-6), "mismatch vs reference"

    print("KERNEL_OK")
</pallas_src>

<mosaic_0001>
module attributes {stable_mosaic.version = 11 : i64} {
  func.func @kernel(%arg0: i32, %arg1: memref<16x128xf32, #tpu.memory_space<vmem>>, %arg2: memref<16x128xf32, #tpu.memory_space<vmem>>, %arg3: memref<16x128xf32, #tpu.memory_space<vmem>>, %arg4: memref<16x128xf32, #tpu.memory_space<vmem>>, %arg5: memref<16x128xf32, #tpu.memory_space<vmem>>, %arg6: memref<16x384xf32, #tpu.memory_space<vmem>>) attributes {dimension_semantics = [#tpu.dimension_semantics<parallel>], iteration_bounds = array<i64: 1>, scalar_prefetch = 0 : i64, scratch_operands = 0 : i64, tpu.core_type = #tpu.core_type<tc>, window_params = [{transform_indices = @transform_0, window_bounds = array<i64: 16, 128>}, {transform_indices = @transform_1, window_bounds = array<i64: 16, 128>}, {transform_indices = @transform_2, window_bounds = array<i64: 16, 128>}, {transform_indices = @transform_3, window_bounds = array<i64: 16, 128>}, {transform_indices = @transform_4, window_bounds = array<i64: 16, 128>}, {transform_indices = @transform_5, window_bounds = array<i64: 16, 384>}]} {
    %c0 = arith.constant 0 : index
    %c0_0 = arith.constant 0 : index
    %0 = vector.load %arg1[%c0, %c0_0] : memref<16x128xf32, #tpu.memory_space<vmem>>, vector<16x128xf32>
    %c0_1 = arith.constant 0 : index
    %c0_2 = arith.constant 0 : index
    %1 = vector.load %arg2[%c0_1, %c0_2] : memref<16x128xf32, #tpu.memory_space<vmem>>, vector<16x128xf32>
    %2 = arith.addf %0, %1 : vector<16x128xf32>
    %c0_3 = arith.constant 0 : index
    %c0_4 = arith.constant 0 : index
    %3 = vector.load %arg3[%c0_3, %c0_4] : memref<16x128xf32, #tpu.memory_space<vmem>>, vector<16x128xf32>
    %4 = arith.addf %2, %3 : vector<16x128xf32>
    %c0_5 = arith.constant 0 : index
    %c0_6 = arith.constant 0 : index
    %5 = vector.load %arg6[%c0_5, %c0_6] : memref<16x384xf32, #tpu.memory_space<vmem>>, vector<16x128xf32>
    tpu.vector_store %arg6[%c0_5, %c0_6], %4 {strides = array<i32>} : memref<16x384xf32, #tpu.memory_space<vmem>>, vector<16x128xf32>,
    %c0_7 = arith.constant 0 : index
    %c0_8 = arith.constant 0 : index
    %6 = vector.load %arg4[%c0_7, %c0_8] : memref<16x128xf32, #tpu.memory_space<vmem>>, vector<16x128xf32>
    %c0_9 = arith.constant 0 : index
    %c128 = arith.constant 128 : index
    %7 = vector.load %arg6[%c0_9, %c128] : memref<16x384xf32, #tpu.memory_space<vmem>>, vector<16x128xf32>
    tpu.vector_store %arg6[%c0_9, %c128], %6 {strides = array<i32>} : memref<16x384xf32, #tpu.memory_space<vmem>>, vector<16x128xf32>,
    %c0_10 = arith.constant 0 : index
    %c0_11 = arith.constant 0 : index
    %8 = vector.load %arg5[%c0_10, %c0_11] : memref<16x128xf32, #tpu.memory_space<vmem>>, vector<16x128xf32>
    %c0_12 = arith.constant 0 : index
    %c256 = arith.constant 256 : index
    %9 = vector.load %arg6[%c0_12, %c256] : memref<16x384xf32, #tpu.memory_space<vmem>>, vector<16x128xf32>
    tpu.vector_store %arg6[%c0_12, %c256], %8 {strides = array<i32>} : memref<16x384xf32, #tpu.memory_space<vmem>>, vector<16x128xf32>,
    return
  }
  func.func @transform_0(%arg0: i32) -> (i32, i32) {
    %c0_i32 = arith.constant 0 : i32
    %c0_i32_0 = arith.constant 0 : i32
    return %arg0, %c0_i32 : i32, i32
  }
  func.func @transform_1(%arg0: i32) -> (i32, i32) {
    %c0_i32 = arith.constant 0 : i32
    %c0_i32_0 = arith.constant 0 : i32
    return %arg0, %c0_i32 : i32, i32
  }
  func.func @transform_2(%arg0: i32) -> (i32, i32) {
    %c0_i32 = arith.constant 0 : i32
    %c0_i32_0 = arith.constant 0 : i32
    return %arg0, %c0_i32 : i32, i32
  }
  func.func @transform_3(%arg0: i32) -> (i32, i32) {
    %c0_i32 = arith.constant 0 : i32
    %c0_i32_0 = arith.constant 0 : i32
    return %arg0, %c0_i32 : i32, i32
  }
  func.func @transform_4(%arg0: i32) -> (i32, i32) {
    %c0_i32 = arith.constant 0 : i32
    %c0_i32_0 = arith.constant 0 : i32
    return %arg0, %c0_i32 : i32, i32
  }
  func.func @transform_5(%arg0: i32) -> (i32, i32) {
    %c0_i32 = arith.constant 0 : i32
    %c0_i32_0 = arith.constant 0 : i32
    return %arg0, %c0_i32 : i32, i32
  }
}

</mosaic_0001>

<llo_original>
// kernel: tpu_custom_call.1
$region0: #{tpu_custom_call.1}
  #allocation0 [shape = 'u32[]', space=smem, size = 0x4, offset = 0x4, fixed_abs, tag = 'smem constant byte address 0x4 - core index']
  #allocation1 [shape = 'u32[72,128]{1,0:T(1,128)}', space=vmem, size = 0x9000, scoped, tag = 'internal scratch']
  %s0 = inlined_call_operand.hbm [shape: f32[16,128], index: 0, kind: input, shape index: {}]
  %s1 = inlined_call_operand.hbm [shape: f32[16,128], index: 1, kind: input, shape index: {}]
  %s2 = inlined_call_operand.hbm [shape: f32[16,128], index: 2, kind: input, shape index: {}]
  %s3 = inlined_call_operand.hbm [shape: f32[16,128], index: 3, kind: input, shape index: {}]
  %s4 = inlined_call_operand.hbm [shape: f32[16,128], index: 4, kind: input, shape index: {}]
  %s5 = inlined_call_operand.hbm [shape: f32[16,384], index: 5, kind: output, shape index: {}]
  %s6 = sld [smem:[#allocation0]]
  $region50: #{tpu_custom_call.1} parent=0
    _
  %s8 = ssub.s32 1, %s6
  %s9 = scalar_select 0, %s8, %s6
  $region1: #{tpu_custom_call.1} parent=0
    #allocation2 [shape = 'u8[8192]{0}', space=vmem, size = 0x2000, scoped, tag = 'input window, operand 0, single buffered']
    #allocation3 [shape = 's32[1]{0}', space=sflag, size = 0x4, scoped, tag = 'scoped memory for tpu_custom_call.1']
    #allocation4 [shape = 's32[1]{0}', space=sflag, size = 0x4, scoped, tag = 'scoped memory for tpu_custom_call.1']
    #allocation5 [shape = 'u8[8192]{0}', space=vmem, size = 0x2000, scoped, tag = 'input window, operand 1, single buffered']
    #allocation6 [shape = 's32[1]{0}', space=sflag, size = 0x4, scoped, tag = 'scoped memory for tpu_custom_call.1']
    #allocation7 [shape = 'u8[8192]{0}', space=vmem, size = 0x2000, scoped, tag = 'input window, operand 2, single buffered']
    #allocation8 [shape = 'u8[8192]{0}', space=vmem, size = 0x2000, scoped, tag = 'input window, operand 3, single buffered']
    #allocation9 [shape = 's32[1]{0}', space=sflag, size = 0x4, scoped, tag = 'scoped memory for tpu_custom_call.1']
    #allocation10 [shape = 'u8[8192]{0}', space=vmem, size = 0x2000, scoped, tag = 'input window, operand 4, single buffered']
    #allocation11 [shape = 'u8[24576]{0}', space=vmem, size = 0x6000, scoped, tag = 'output window, operand 0, single buffered']
    %10 = vsyncpa [#allocation3], 0
    %11 = vsyncpa [#allocation6], 0
    %12 = vsyncpa [#allocation9], 0
    %13 = vsyncpa [#allocation4], 0
    // Predicated region
    $region2: #{tpu_custom_call.1} parent=1 // pred_check
      _
    $region3: #{tpu_custom_call.1} parent=1 // pred_check_branch
      %15 = sbr.rel (0) target = $region5
    $region4: #{tpu_custom_call.1} parent=1 // pred_region
      %17 = vsyncadd [#allocation3], 0
      %s18 = sshll.u32 %s0, 4
      %s19 = int_to_ptr.hbm [resolvable:$true] %s18
      %s20 = sshll.u32 [#allocation2], 4
      %s21 = int_to_ptr.vmem [resolvable:$true] %s20
      %26 = dma.hbm_to_vmem [thread:$0]  %s19, 256, %s21, [#allocation3], 128, 128, 8
    $region5: #{tpu_custom_call.1} parent=1 // pred_fallthru
      _
    // Predicated region
    $region6: #{tpu_custom_call.1} parent=1 // pred_check
      _
    $region7: #{tpu_custom_call.1} parent=1 // pred_check_branch
      %28 = sbr.rel (0) target = $region9
    $region8: #{tpu_custom_call.1} parent=1 // pred_region
      %30 = vsyncadd [#allocation6], 0
      %s31 = sshll.u32 %s1, 4
      %s32 = int_to_ptr.hbm [resolvable:$true] %s31
      %s33 = sshll.u32 [#allocation5], 4
      %s34 = int_to_ptr.vmem [resolvable:$true] %s33
      %39 = dma.hbm_to_vmem [thread:$0]  %s32, 256, %s34, [#allocation6], 128, 128, 8
    $region9: #{tpu_custom_call.1} parent=1 // pred_fallthru
      _
    // Predicated region
    $region10: #{tpu_custom_call.1} parent=1 // pred_check
      _
    $region11: #{tpu_custom_call.1} parent=1 // pred_check_branch
      %41 = sbr.rel (0) target = $region13
    $region12: #{tpu_custom_call.1} parent=1 // pred_region
      %43 = vsyncadd [#allocation6], 0
      %s44 = sshll.u32 %s2, 4
      %s45 = int_to_ptr.hbm [resolvable:$true] %s44
      %s46 = sshll.u32 [#allocation7], 4
      %s47 = int_to_ptr.vmem [resolvable:$true] %s46
      %52 = dma.hbm_to_vmem [thread:$0]  %s45, 256, %s47, [#allocation6], 128, 128, 8
    $region13: #{tpu_custom_call.1} parent=1 // pred_fallthru
      _
    // Predicated region
    $region14: #{tpu_custom_call.1} parent=1 // pred_check
      _
    $region15: #{tpu_custom_call.1} parent=1 // pred_check_branch
      %54 = sbr.rel (0) target = $region17
    $region16: #{tpu_custom_call.1} parent=1 // pred_region
      %56 = vsyncadd [#allocation9], 0
      %s57 = sshll.u32 %s3, 4
      %s58 = int_to_ptr.hbm [resolvable:$true] %s57
      %s59 = sshll.u32 [#allocation8], 4
      %s60 = int_to_ptr.vmem [resolvable:$true] %s59
      %65 = dma.hbm_to_vmem [thread:$0]  %s58, 256, %s60, [#allocation9], 128, 128, 8
    $region17: #{tpu_custom_call.1} parent=1 // pred_fallthru
      _
    // Predicated region
    $region18: #{tpu_custom_call.1} parent=1 // pred_check
      _
    $region19: #{tpu_custom_call.1} parent=1 // pred_check_branch
      %67 = sbr.rel (0) target = $region21
    $region20: #{tpu_custom_call.1} parent=1 // pred_region
      %69 = vsyncadd [#allocation9], 0
      %s70 = sshll.u32 %s4, 4
      %s71 = int_to_ptr.hbm [resolvable:$true] %s70
      %s72 = sshll.u32 [#allocation10], 4
      %s73 = int_to_ptr.vmem [resolvable:$true] %s72
      %78 = dma.hbm_to_vmem [thread:$0]  %s71, 256, %s73, [#allocation9], 128, 128, 8
    $region21: #{tpu_custom_call.1} parent=1 // pred_fallthru
      _
    // Predicated region
    $region22: #{tpu_custom_call.1} parent=1 // pred_check
      _
    $region23: #{tpu_custom_call.1} parent=1 // pred_check_branch
      %80 = sbr.rel (0) target = $region25
    $region24: #{tpu_custom_call.1} parent=1 // pred_region
      %82 = dma.done [#allocation3], 256
    $region25: #{tpu_custom_call.1} parent=1 // pred_fallthru
      _
    // Predicated region
    $region26: #{tpu_custom_call.1} parent=1 // pred_check
      _
    $region27: #{tpu_custom_call.1} parent=1 // pred_check_branch
      %84 = sbr.rel (0) target = $region29
    $region28: #{tpu_custom_call.1} parent=1 // pred_region
      %86 = dma.done [#allocation6], 256
    $region29: #{tpu_custom_call.1} parent=1 // pred_fallthru
      _
    // Predicated region
    $region30: #{tpu_custom_call.1} parent=1 // pred_check
      _
    $region31: #{tpu_custom_call.1} parent=1 // pred_check_branch
      %88 = sbr.rel (0) target = $region33
    $region32: #{tpu_custom_call.1} parent=1 // pred_region
      %90 = dma.done [#allocation6], 256
    $region33: #{tpu_custom_call.1} parent=1 // pred_fallthru
      _
    // Predicated region
    $region34: #{tpu_custom_call.1} parent=1 // pred_check
      _
    $region35: #{tpu_custom_call.1} parent=1 // pred_check_branch
      %92 = sbr.rel (0) target = $region37
    $region36: #{tpu_custom_call.1} parent=1 // pred_region
      %94 = dma.done [#allocation9], 256
    $region37: #{tpu_custom_call.1} parent=1 // pred_fallthru
      _
    // Predicated region
    $region38: #{tpu_custom_call.1} parent=1 // pred_check
      _
    $region39: #{tpu_custom_call.1} parent=1 // pred_check_branch
      %96 = sbr.rel (0) target = $region41
    $region40: #{tpu_custom_call.1} parent=1 // pred_region
      %98 = dma.done [#allocation9], 256
    $region41: #{tpu_custom_call.1} parent=1 // pred_fallthru
      _
    %v99 = vld [vmem:[#allocation2] sm:$0xff]
    %v100 = vld [vmem:[#allocation2 + $0x8] sm:$0xff]
    %v101 = vld [vmem:[#allocation5] sm:$0xff]
    %v102 = vld [vmem:[#allocation5 + $0x8] sm:$0xff]
    %v103 = vadd.f32 %v99, %v101
    %v104 = vadd.f32 %v100, %v102
    %v105 = vld [vmem:[#allocation7] sm:$0xff]
    %v106 = vld [vmem:[#allocation7 + $0x8] sm:$0xff]
    %v107 = vadd.f32 %v103, %v105
    %v108 = vadd.f32 %v104, %v106
    %109 = vst [vmem:[#allocation11] sm:$0xff] %v107
    %110 = vst [vmem:[#allocation11 + $0x18] sm:$0xff] %v108
    %v111 = vld [vmem:[#allocation8] sm:$0xff]
    %v112 = vld [vmem:[#allocation8 + $0x8] sm:$0xff]
    %113 = vst [vmem:[#allocation11 + $0x8] sm:$0xff] %v111
    %114 = vst [vmem:[#allocation11 + $0x20] sm:$0xff] %v112
    %v115 = vld [vmem:[#allocation10] sm:$0xff]
    %v116 = vld [vmem:[#allocation10 + $0x8] sm:$0xff]
    %117 = vst [vmem:[#allocation11 + $0x10] sm:$0xff] %v115
    %118 = vst [vmem:[#allocation11 + $0x28] sm:$0xff] %v116
    // Predicated region
    $region42: #{tpu_custom_call.1} parent=1 // pred_check
      _
    $region43: #{tpu_custom_call.1} parent=1 // pred_check_branch
      %120 = sbr.rel (0) target = $region45
    $region44: #{tpu_custom_call.1} parent=1 // pred_region
      %122 = vsyncadd [#allocation4], 0
      %s123 = sshll.u32 [#allocation11], 4
      %s124 = int_to_ptr.vmem [resolvable:$true] %s123
      %s125 = sshll.u32 %s5, 4
      %s126 = int_to_ptr.hbm [resolvable:$true] %s125
      %131 = dma.vmem_to_hbm [thread:$0]  %s124, 768, %s126, [#allocation4], 384, 384, 24
    $region45: #{tpu_custom_call.1} parent=1 // pred_fallthru
      _
    // Predicated region
    $region46: #{tpu_custom_call.1} parent=1 // pred_check
      _
    $region47: #{tpu_custom_call.1} parent=1 // pred_check_branch
      %133 = sbr.rel (0) target = $region49
    $region48: #{tpu_custom_call.1} parent=1 // pred_region
      %135 = dma.done [#allocation4], 768
    $region49: #{tpu_custom_call.1} parent=1 // pred_fallthru
      _
    %136 = vsyncpa [#allocation3], 1
    %137 = vsyncpa [#allocation6], 1
    %138 = vsyncpa [#allocation9], 1
    %139 = vsyncpa [#allocation4], 1

</llo_original>
